<compile_context>
chip_gen: v7x
topology: tpu7x:2x2x1
jax: 0.10.0
libtpu: 0.0.40
codegen_flags: <defaults>
</compile_context>

<pallas_src>
import math

import jax
import jax.numpy as jnp
from jax.experimental import pallas as pl
from jax.experimental.pallas import tpu as pltpu

_NEG = -1e30  # finite "-inf": exp(_NEG - max) underflows to 0 exactly
_VMEM_LIMIT = 48 * 1024 * 1024  # fits v7x (64 MiB); can be raised on v5e/v6e


# ----------------------------------------------------------------------------
# Stage A kernel: one level's conv downsampling of K and V as a tiled GEMM
# ----------------------------------------------------------------------------
def _conv_ds_kernel(kr_ref, vr_ref, wk_ref, wv_ref, bk_ref, bv_ref,
                    ok_ref, ov_ref, acck_ref, accv_ref):
    kk = pl.program_id(1)

    @pl.when(kk == 0)
    def _():
        acck_ref[...] = jnp.zeros_like(acck_ref)
        accv_ref[...] = jnp.zeros_like(accv_ref)

    acck_ref[...] += jnp.dot(kr_ref[...].astype(jnp.bfloat16), wk_ref[...],
                             preferred_element_type=jnp.float32)
    accv_ref[...] += jnp.dot(vr_ref[...].astype(jnp.bfloat16), wv_ref[...],
                             preferred_element_type=jnp.float32)

    @pl.when(kk == pl.num_programs(1) - 1)
    def _():
        ok_ref[...] = (acck_ref[...] + bk_ref[...]).astype(ok_ref.dtype)
        ov_ref[...] = (accv_ref[...] + bv_ref[...]).astype(ov_ref.dtype)


# ----------------------------------------------------------------------------
# Stage B kernel: fused multi-level attention over one query tile
# ----------------------------------------------------------------------------
def _make_attn_kernel(m, d, tq, nc, fold):
    inv_sqrt_d = 1.0 / math.sqrt(d)

    def kernel(q_ref, k_ref, v_ref, kct_ref, vc_ref, fb_ref,
               lo_ref, hi_ref, lb_ref, o_ref):
        t = pl.program_id(1)

        # lane-dense (tq//fold, fold*d) blocks -> logical (tq, d)
        q = q_ref[0].reshape(tq, d).astype(jnp.float32) * inv_sqrt_d
        qb = q.astype(jnp.bfloat16)
        k = k_ref[0].reshape(tq, d).astype(jnp.bfloat16)
        v = v_ref[0].reshape(tq, d).astype(jnp.bfloat16)

        # ---- fine level: one (tq, tq) GEMM + precomputed block-causal bias --
        s_f = jax.lax.dot_general(qb, k, (((1,), (1,)), ((), ())),
                                  preferred_element_type=jnp.float32)
        s_f = s_f + fb_ref[...]                              # 0 / _NEG bias

        # ---- all coarse levels fused: one (tq, nc) GEMM vs. KC^T ------------
        s_c = jnp.dot(qb, kct_ref[0], preferred_element_type=jnp.float32)
        qi = t * tq + jax.lax.broadcasted_iota(jnp.int32, (tq, 1), 0)
        valid = (qi >= lo_ref[...]) & (qi < hi_ref[...])     # (tq, nc)
        s_c = jnp.where(valid, s_c + lb_ref[...], _NEG)      # scale as log-bias

        # ---- joint softmax across levels -------------------------------------
        mx = jnp.maximum(jnp.max(s_f, axis=1, keepdims=True),
                         jnp.max(s_c, axis=1, keepdims=True))
        e_f = jnp.exp(s_f - mx)
        e_c = jnp.exp(s_c - mx)
        den = (jnp.sum(e_f, axis=1, keepdims=True)
               + jnp.sum(e_c, axis=1, keepdims=True))

        # ---- weighted values, single exact reciprocal at the end ------------
        acc = jnp.dot(e_f.astype(jnp.bfloat16), v,
                      preferred_element_type=jnp.float32)
        acc = acc + jnp.dot(e_c.astype(jnp.bfloat16), vc_ref[0],
                            preferred_element_type=jnp.float32)
        out = acc * pl.reciprocal(den)                       # exact (approx=False)
        o_ref[0] = out.reshape(tq // fold, fold * d).astype(o_ref.dtype)

    return kernel


# ----------------------------------------------------------------------------
# Host-side glue
# ----------------------------------------------------------------------------
def _repack_conv(W, b, d, p, w):
    """Repack nn.Conv1d(d, p*d, w, stride=w) weights into an MXU-friendly matrix.

    Returns (W3T, b3) with W3T[k*d + c, pp*d + dd] = W[dd*p + pp, c, k] so that
    (block of K flattened row-major as (w*d,)) @ W3T + b3 yields the p coarse
    summaries of that block, p contiguous chunks of d features — exactly the
    module's view(b,d,p,·)/transpose(1,3)/reshape(b, nl, d) ordering.
    """
    W4 = jnp.asarray(W).reshape(d, p, d, w)                      # [dd, pp, c, k]
    W3 = jnp.transpose(W4, (1, 0, 3, 2)).reshape(p * d, w * d)   # [pp*d+dd, k*d+c]
    b3 = jnp.asarray(b).reshape(d, p).T.reshape(1, p * d)        # [pp*d+dd]
    return W3.T, b3


def _pick_tile(size, cap, mult):
    """Largest tile <= cap that divides `size` and is a multiple of `mult`."""
    if size <= cap:
        return size
    t = (cap // mult) * mult
    while t >= mult:
        if size % t == 0:
            return t
        t -= mult
    return size


def mha_pallas(Q, K, V, conv_k, conv_v, *, m, p, scale_attn=True, tq=None):
    B, n, d = Q.shape
    L = int(math.log2(n // m)) - 1
    assert L >= 1, "need at least one coarse level (n >= 4*m)"
    assert len(conv_k) == L and len(conv_v) == L

    # ---------------- Stage A: per-level conv downsample of K/V --------------
    KCs, VCs, lo_l, hi_l, lb_l = [], [], [], [], []
    for l in range(L):
        w = m * (2 ** l)
        nblk = n // w
        R, KD = B * nblk, w * d
        wk, bk = _repack_conv(conv_k[l][0], conv_k[l][1], d, p, w)
        wv, bv = _repack_conv(conv_v[l][0], conv_v[l][1], d, p, w)
        KR = K.reshape(R, KD)            # free row-major views of K / V
        VR = V.reshape(R, KD)
        tr = _pick_tile(R, 512, 8)       # rows per MXU weight load: B*n/w
        tk = _pick_tile(KD, 2048, 128)   # contraction tiling (v7x VMEM)
        grid = (R // tr, KD // tk)

        ok, ov = pl.pallas_call(
            _conv_ds_kernel,
            out_shape=(jax.ShapeDtypeStruct((R, p * d), jnp.bfloat16),
                       jax.ShapeDtypeStruct((R, p * d), jnp.bfloat16)),
            grid_spec=pltpu.PrefetchScalarGridSpec(
                num_scalar_prefetch=0, grid=grid,
                in_specs=[
                    pl.BlockSpec((tr, tk), lambda r, k: (r, k)),
                    pl.BlockSpec((tr, tk), lambda r, k: (r, k)),
                    pl.BlockSpec((tk, p * d), lambda r, k: (k, 0)),
                    pl.BlockSpec((tk, p * d), lambda r, k: (k, 0)),
                    pl.BlockSpec((1, p * d), lambda r, k: (0, 0)),
                    pl.BlockSpec((1, p * d), lambda r, k: (0, 0)),
                ],
                out_specs=(pl.BlockSpec((tr, p * d), lambda r, k: (r, 0)),
                           pl.BlockSpec((tr, p * d), lambda r, k: (r, 0))),
                scratch_shapes=[pltpu.VMEM((tr, p * d), jnp.float32),
                                pltpu.VMEM((tr, p * d), jnp.float32)]),
            compiler_params=pltpu.CompilerParams(
                dimension_semantics=("parallel", "arbitrary"),
                vmem_limit_bytes=_VMEM_LIMIT),
        )(KR, VR, wk.astype(jnp.bfloat16), wv.astype(jnp.bfloat16), bk, bv)

        # Free reshapes: row (b*nblk + blk), col (pp*d + dd) -> (B, nblk*p, d)
        KCs.append(ok.reshape(B, nblk * p, d))
        VCs.append(ov.reshape(B, nblk * p, d))

        # Per-key metadata: query i attends coarse key j iff lo[j] <= i < hi[j]
        blk = jnp.repeat(jnp.arange(nblk, dtype=jnp.int32), p)
        lo_l.append((blk + 1) * w)
        hi_l.append((blk + 2) * w)
        s = float(w // p) if scale_attn else 1.0
        lb_l.append(jnp.full((nblk * p,), math.log(s), jnp.float32))

    KC = jnp.concatenate(KCs, axis=1)               # (B, NC, d) bf16
    VC = jnp.concatenate(VCs, axis=1)               # (B, NC, d) bf16
    KCT = jnp.swapaxes(KC, 1, 2)                    # (B, d, NC): one host transpose
    lo = jnp.concatenate(lo_l).reshape(1, -1)       # (1, NC) int32
    hi = jnp.concatenate(hi_l).reshape(1, -1)
    lb = jnp.concatenate(lb_l).reshape(1, -1)       # (1, NC) f32, log-scale bias
    NC = KC.shape[1]

    # ---------------- Stage B: fused multi-level attention -------------------
    if tq is None:
        tq = m
        while tq * 2 <= n and tq * 2 <= 512:
            tq *= 2
    assert n % tq == 0 and tq % m == 0

    # Lane-dense folding factor: present last dim as fold*d (>= 128 when d<128).
    fold = 1
    if d < 128 and 128 % d == 0:
        f = 128 // d
        if n % f == 0 and tq % f == 0 and ((tq // f) % 8 == 0 or tq == n):
            fold = f
    assert (tq // fold) % 8 == 0 or tq == n

    QF = Q.reshape(B, n // fold, fold * d)          # free row-major views
    KF = K.reshape(B, n // fold, fold * d)
    VF = V.reshape(B, n // fold, fold * d)

    # Host-precomputed additive block-causal bias for the fine level (tq, tq).
    ri = jnp.arange(tq, dtype=jnp.int32)[:, None]
    ci = jnp.arange(tq, dtype=jnp.int32)[None, :]
    fine_bias = jnp.where((ci <= ri) & ((ci // m) == (ri // m)),
                          0.0, _NEG).astype(jnp.float32)

    grid = (B, n // tq)
    qkv_spec = pl.BlockSpec((1, tq // fold, fold * d), lambda b, t: (b, t, 0))
    kct_spec = pl.BlockSpec((1, d, NC), lambda b, t: (b, 0, 0))
    vc_spec = pl.BlockSpec((1, NC, d), lambda b, t: (b, 0, 0))
    fb_spec = pl.BlockSpec((tq, tq), lambda b, t: (0, 0))
    meta_spec = pl.BlockSpec((1, NC), lambda b, t: (0, 0))

    out = pl.pallas_call(
        _make_attn_kernel(m, d, tq, NC, fold),
        out_shape=jax.ShapeDtypeStruct((B, n // fold, fold * d), Q.dtype),
        grid_spec=pltpu.PrefetchScalarGridSpec(
            num_scalar_prefetch=0, grid=grid,
            in_specs=[qkv_spec, qkv_spec, qkv_spec, kct_spec, vc_spec,
                      fb_spec, meta_spec, meta_spec, meta_spec],
            out_specs=qkv_spec),
        compiler_params=pltpu.CompilerParams(
            dimension_semantics=("parallel", "parallel"),
            vmem_limit_bytes=_VMEM_LIMIT),
    )(QF, KF, VF, KCT, VC, fine_bias, lo, hi, lb)
    return out.reshape(B, n, d)


# ----------------------------------------------------------------------------
# Pure-JAX reference (f32, same math, no Pallas) for a correctness check
# ----------------------------------------------------------------------------
def mha_reference(Q, K, V, conv_k, conv_v, *, m, p, scale_attn=True):
    B, n, d = Q.shape
    L = int(math.log2(n // m)) - 1
    Qs = Q / math.sqrt(d)

    def downsample(X, W, b, w):
        nblk = n // w
        Xb = X.reshape(B, nblk, w, d)
        out = jnp.einsum('btkc,ock->bto', Xb, W) + b          # o = dd*p + pp
        out = out.reshape(B, nblk, d, p).transpose(0, 1, 3, 2)
        return out.reshape(B, nblk * p, d)

    Kls, Vls = [K], [V]
    for l in range(L):
        w = m * (2 ** l)
        Kls.append(downsample(K, conv_k[l][0], conv_k[l][1], w))
        Vls.append(downsample(V, conv_v[l][0], conv_v[l][1], w))

    qi = jnp.arange(n)[:, None]
    As, scales = [], []
    for l in range(L + 1):
        Kl = Kls[l]
        S = jnp.einsum('bid,bjd->bij', Qs, Kl)
        kj = jnp.arange(Kl.shape[1])[None, :]
        if l == 0:
            mask = (qi // m == kj // m) & (kj <= qi)
            scales.append(1.0)
        else:
            w = m * (2 ** (l - 1))
            mask = (kj // p) == (qi // w) - 1
            scales.append(float(w // p) if scale_attn else 1.0)
        As.append(jnp.where(mask[None], S, _NEG))

    mx = jnp.max(jnp.stack([A.max(axis=2) for A in As], axis=-1),
                 axis=-1, keepdims=True)
    exps = [jnp.exp(A - mx) for A in As]
    denom = sum(s * e.sum(axis=2, keepdims=True) for s, e in zip(scales, exps))
    out = sum(jnp.einsum('bij,bjd->bid', s * e / denom, Vl)
              for s, e, Vl in zip(scales, exps, Vls))
    return out


# ----------------------------------------------------------------------------
if __name__ == "__main__":
    # Small shapes consistent with the module: n/m a power of 2, n % m == 0.
    B, n, d, m, p = 2, 64, 32, 8, 2
    scale_attn = True
    attn_pdrop = 0.0              # dropout is identity at p=0 (matches PyTorch)
    L = int(math.log2(n // m)) - 1   # = 2

    key = jax.random.PRNGKey(0)
    key, kq, kk, kv = jax.random.split(key, 4)
    Q = jax.random.normal(kq, (B, n, d), jnp.float32)
    K = jax.random.normal(kk, (B, n, d), jnp.float32)
    V = jax.random.normal(kv, (B, n, d), jnp.float32)

    # downsampling == 'conv': nn.Conv1d(d, p*d, w, stride=w) weights per level,
    # deterministically initialized (PyTorch-style uniform bound 1/sqrt(d*w)).
    conv_k, conv_v = [], []
    for l in range(L):
        w = m * (2 ** l)
        bound = 1.0 / math.sqrt(d * w)
        key, k1, k2, k3, k4 = jax.random.split(key, 5)
        conv_k.append((jax.random.uniform(k1, (p * d, d, w), jnp.float32, -bound, bound),
                       jax.random.uniform(k2, (p * d,), jnp.float32, -bound, bound)))
        conv_v.append((jax.random.uniform(k3, (p * d, d, w), jnp.float32, -bound, bound),
                       jax.random.uniform(k4, (p * d,), jnp.float32, -bound, bound)))

    # tq=32 -> 2 query tiles per batch element, exercising the query-tile grid
    # and the lane-dense fold=4 layout.
    out = mha_pallas(Q, K, V, conv_k, conv_v, m=m, p=p,
                     scale_attn=scale_attn, tq=32)
    out = jax.block_until_ready(out)
    assert out.shape == (B, n, d)

    ref = mha_reference(Q, K, V, conv_k, conv_v, m=m, p=p, scale_attn=scale_attn)
    err = float(jnp.max(jnp.abs(out - ref)))
    # bf16 MXU operands in the kernel vs. a pure-f32 reference -> allow a
    # bf16-sized tolerance.
    if not err < 1e-1:
        raise AssertionError(f"kernel/reference mismatch, max abs err = {err}")

    print("KERNEL_OK")
</pallas_src>

<mosaic_0001>
module attributes {stable_mosaic.version = 11 : i64} {
  func.func @_conv_ds_kernel(%arg0: i32, %arg1: i32, %arg2: memref<16x256xf32, #tpu.memory_space<vmem>>, %arg3: memref<16x256xf32, #tpu.memory_space<vmem>>, %arg4: memref<256x64xbf16, #tpu.memory_space<vmem>>, %arg5: memref<256x64xbf16, #tpu.memory_space<vmem>>, %arg6: memref<1x64xf32, #tpu.memory_space<vmem>>, %arg7: memref<1x64xf32, #tpu.memory_space<vmem>>, %arg8: memref<16x64xbf16, #tpu.memory_space<vmem>>, %arg9: memref<16x64xbf16, #tpu.memory_space<vmem>>, %arg10: memref<16x64xf32, #tpu.memory_space<vmem>>, %arg11: memref<16x64xf32, #tpu.memory_space<vmem>>) attributes {dimension_semantics = [#tpu.dimension_semantics<parallel>, #tpu.dimension_semantics<arbitrary>], iteration_bounds = array<i64: 1, 1>, scalar_prefetch = 0 : i64, scratch_operands = 2 : i64, tpu.core_type = #tpu.core_type<tc>, window_params = [{transform_indices = @transform_0, window_bounds = array<i64: 16, 256>}, {transform_indices = @transform_1, window_bounds = array<i64: 16, 256>}, {transform_indices = @transform_2, window_bounds = array<i64: 256, 64>}, {transform_indices = @transform_3, window_bounds = array<i64: 256, 64>}, {pipeline_mode = #tpu.pipeline_mode<synchronous>, transform_indices = @transform_4, window_bounds = array<i64: 1, 64>}, {pipeline_mode = #tpu.pipeline_mode<synchronous>, transform_indices = @transform_5, window_bounds = array<i64: 1, 64>}, {transform_indices = @transform_6, window_bounds = array<i64: 16, 64>}, {transform_indices = @transform_7, window_bounds = array<i64: 16, 64>}]} {
    %c0_i32 = arith.constant 0 : i32
    %0 = arith.cmpi eq, %arg1, %c0_i32 : i32
    %1 = arith.extui %0 : i1 to i32
    %c0_i32_0 = arith.constant 0 : i32
    %2 = arith.cmpi ne, %1, %c0_i32_0 : i32
    scf.if %2 {
      %cst_19 = arith.constant 0.000000e+00 : f32
      %20 = vector.broadcast %cst_19 : f32 to vector<16x64xf32>
      %c0_20 = arith.constant 0 : index
      %c0_21 = arith.constant 0 : index
      %21 = vector.load %arg10[%c0_20, %c0_21] : memref<16x64xf32, #tpu.memory_space<vmem>>, vector<16x64xf32>
      tpu.vector_store %arg10[%c0_20, %c0_21], %20 {strides = array<i32>} : memref<16x64xf32, #tpu.memory_space<vmem>>, vector<16x64xf32>,
      %cst_22 = arith.constant 0.000000e+00 : f32
      %22 = vector.broadcast %cst_22 : f32 to vector<16x64xf32>
      %c0_23 = arith.constant 0 : index
      %c0_24 = arith.constant 0 : index
      %23 = vector.load %arg11[%c0_23, %c0_24] : memref<16x64xf32, #tpu.memory_space<vmem>>, vector<16x64xf32>
      tpu.vector_store %arg11[%c0_23, %c0_24], %22 {strides = array<i32>} : memref<16x64xf32, #tpu.memory_space<vmem>>, vector<16x64xf32>,
    } else {
    }
    %c0 = arith.constant 0 : index
    %c0_1 = arith.constant 0 : index
    %3 = vector.load %arg10[%c0, %c0_1] : memref<16x64xf32, #tpu.memory_space<vmem>>, vector<16x64xf32>
    %c0_2 = arith.constant 0 : index
    %c0_3 = arith.constant 0 : index
    %4 = vector.load %arg2[%c0_2, %c0_3] : memref<16x256xf32, #tpu.memory_space<vmem>>, vector<16x256xf32>
    %5 = arith.truncf %4 : vector<16x256xf32> to vector<16x256xbf16>
    %c0_4 = arith.constant 0 : index
    %c0_5 = arith.constant 0 : index
    %6 = vector.load %arg4[%c0_4, %c0_5] : memref<256x64xbf16, #tpu.memory_space<vmem>>, vector<256x64xbf16>
    %cst = arith.constant dense<0.000000e+00> : vector<16x64xf32>
    %7 = tpu.matmul %5, %6, %cst {dimension_numbers = #tpu.dot_dimension_numbers<[1], [0], [0], [1], [0, 0, 1, 1], [], []>} : vector<16x256xbf16>, vector<256x64xbf16>, vector<16x64xf32> -> vector<16x64xf32>
    %8 = arith.addf %3, %7 : vector<16x64xf32>
    %c0_6 = arith.constant 0 : index
    %c0_7 = arith.constant 0 : index
    %9 = vector.load %arg10[%c0_6, %c0_7] : memref<16x64xf32, #tpu.memory_space<vmem>>, vector<16x64xf32>
    tpu.vector_store %arg10[%c0_6, %c0_7], %8 {strides = array<i32>} : memref<16x64xf32, #tpu.memory_space<vmem>>, vector<16x64xf32>,
    %c0_8 = arith.constant 0 : index
    %c0_9 = arith.constant 0 : index
    %10 = vector.load %arg11[%c0_8, %c0_9] : memref<16x64xf32, #tpu.memory_space<vmem>>, vector<16x64xf32>
    %c0_10 = arith.constant 0 : index
    %c0_11 = arith.constant 0 : index
    %11 = vector.load %arg3[%c0_10, %c0_11] : memref<16x256xf32, #tpu.memory_space<vmem>>, vector<16x256xf32>
    %12 = arith.truncf %11 : vector<16x256xf32> to vector<16x256xbf16>
    %c0_12 = arith.constant 0 : index
    %c0_13 = arith.constant 0 : index
    %13 = vector.load %arg5[%c0_12, %c0_13] : memref<256x64xbf16, #tpu.memory_space<vmem>>, vector<256x64xbf16>
    %cst_14 = arith.constant dense<0.000000e+00> : vector<16x64xf32>
    %14 = tpu.matmul %12, %13, %cst_14 {dimension_numbers = #tpu.dot_dimension_numbers<[1], [0], [0], [1], [0, 0, 1, 1], [], []>} : vector<16x256xbf16>, vector<256x64xbf16>, vector<16x64xf32> -> vector<16x64xf32>
    %15 = arith.addf %10, %14 : vector<16x64xf32>
    %c0_15 = arith.constant 0 : index
    %c0_16 = arith.constant 0 : index
    %16 = vector.load %arg11[%c0_15, %c0_16] : memref<16x64xf32, #tpu.memory_space<vmem>>, vector<16x64xf32>
    tpu.vector_store %arg11[%c0_15, %c0_16], %15 {strides = array<i32>} : memref<16x64xf32, #tpu.memory_space<vmem>>, vector<16x64xf32>,
    %c0_i32_17 = arith.constant 0 : i32
    %17 = arith.cmpi eq, %arg1, %c0_i32_17 : i32
    %18 = arith.extui %17 : i1 to i32
    %c0_i32_18 = arith.constant 0 : i32
    %19 = arith.cmpi ne, %18, %c0_i32_18 : i32
    scf.if %19 {
      %c0_19 = arith.constant 0 : index
      %c0_20 = arith.constant 0 : index
      %20 = vector.load %arg10[%c0_19, %c0_20] : memref<16x64xf32, #tpu.memory_space<vmem>>, vector<16x64xf32>
      %c0_21 = arith.constant 0 : index
      %c0_22 = arith.constant 0 : index
      %21 = vector.load %arg6[%c0_21, %c0_22] : memref<1x64xf32, #tpu.memory_space<vmem>>, vector<1x64xf32>
      %22 = vector.broadcast %21 : vector<1x64xf32> to vector<16x64xf32>
      %23 = arith.addf %20, %22 : vector<16x64xf32>
      %24 = arith.truncf %23 : vector<16x64xf32> to vector<16x64xbf16>
      %c0_23 = arith.constant 0 : index
      %c0_24 = arith.constant 0 : index
      %25 = vector.load %arg8[%c0_23, %c0_24] : memref<16x64xbf16, #tpu.memory_space<vmem>>, vector<16x64xbf16>
      tpu.vector_store %arg8[%c0_23, %c0_24], %24 {strides = array<i32>} : memref<16x64xbf16, #tpu.memory_space<vmem>>, vector<16x64xbf16>,
      %c0_25 = arith.constant 0 : index
      %c0_26 = arith.constant 0 : index
      %26 = vector.load %arg11[%c0_25, %c0_26] : memref<16x64xf32, #tpu.memory_space<vmem>>, vector<16x64xf32>
      %c0_27 = arith.constant 0 : index
      %c0_28 = arith.constant 0 : index
      %27 = vector.load %arg7[%c0_27, %c0_28] : memref<1x64xf32, #tpu.memory_space<vmem>>, vector<1x64xf32>
      %28 = vector.broadcast %27 : vector<1x64xf32> to vector<16x64xf32>
      %29 = arith.addf %26, %28 : vector<16x64xf32>
      %30 = arith.truncf %29 : vector<16x64xf32> to vector<16x64xbf16>
      %c0_29 = arith.constant 0 : index
      %c0_30 = arith.constant 0 : index
      %31 = vector.load %arg9[%c0_29, %c0_30] : memref<16x64xbf16, #tpu.memory_space<vmem>>, vector<16x64xbf16>
      tpu.vector_store %arg9[%c0_29, %c0_30], %30 {strides = array<i32>} : memref<16x64xbf16, #tpu.memory_space<vmem>>, vector<16x64xbf16>,
    } else {
    }
    return
  }
  func.func @transform_0(%arg0: i32, %arg1: i32) -> (i32, i32) {
    %c0_i32 = arith.constant 0 : i32
    return %arg0, %arg1 : i32, i32
  }
  func.func @transform_1(%arg0: i32, %arg1: i32) -> (i32, i32) {
    %c0_i32 = arith.constant 0 : i32
    return %arg0, %arg1 : i32, i32
  }
  func.func @transform_2(%arg0: i32, %arg1: i32) -> (i32, i32) {
    %c0_i32 = arith.constant 0 : i32
    %c0_i32_0 = arith.constant 0 : i32
    return %arg1, %c0_i32 : i32, i32
  }
  func.func @transform_3(%arg0: i32, %arg1: i32) -> (i32, i32) {
    %c0_i32 = arith.constant 0 : i32
    %c0_i32_0 = arith.constant 0 : i32
    return %arg1, %c0_i32 : i32, i32
  }
  func.func @transform_4(%arg0: i32, %arg1: i32) -> (i32, i32) {
    %c0_i32 = arith.constant 0 : i32
    %c0_i32_0 = arith.constant 0 : i32
    %c0_i32_1 = arith.constant 0 : i32
    return %c0_i32, %c0_i32_0 : i32, i32
  }
  func.func @transform_5(%arg0: i32, %arg1: i32) -> (i32, i32) {
    %c0_i32 = arith.constant 0 : i32
    %c0_i32_0 = arith.constant 0 : i32
    %c0_i32_1 = arith.constant 0 : i32
    return %c0_i32, %c0_i32_0 : i32, i32
  }
  func.func @transform_6(%arg0: i32, %arg1: i32) -> (i32, i32) {
    %c0_i32 = arith.constant 0 : i32
    %c0_i32_0 = arith.constant 0 : i32
    return %arg0, %c0_i32 : i32, i32
  }
  func.func @transform_7(%arg0: i32, %arg1: i32) -> (i32, i32) {
    %c0_i32 = arith.constant 0 : i32
    %c0_i32_0 = arith.constant 0 : i32
    return %arg0, %c0_i32 : i32, i32
  }
}

</mosaic_0001>

<llo_original>
// kernel: tpu_custom_call.1
$region0: #{tpu_custom_call.1}
  #allocation0 [shape = 'u32[]', space=smem, size = 0x4, offset = 0x4, fixed_abs, tag = 'smem constant byte address 0x4 - core index']
  #allocation1 [shape = 'u32[144,128]{1,0:T(1,128)}', space=vmem, size = 0x12000, scoped, tag = 'internal scratch']
  #allocation2 [shape = 'f32[16,64]{1,0:T(8,128)}', space=vmem, size = 0x2000, scoped, tag = 'scratch operand']
  #allocation3 [shape = 'f32[16,64]{1,0:T(8,128)}', space=vmem, size = 0x2000, scoped, tag = 'scratch operand']
  %s0 = inlined_call_operand.vmem [shape: f32[16,256], index: 0, kind: input, shape index: {}]
  %s1 = inlined_call_operand.vmem [shape: f32[16,256], index: 1, kind: input, shape index: {}]
  %s2 = inlined_call_operand.vmem [shape: bf16[256,64], index: 2, kind: input, shape index: {}]
  %s3 = inlined_call_operand.vmem [shape: bf16[256,64], index: 3, kind: input, shape index: {}]
  %s4 = inlined_call_operand.vmem [shape: f32[1,64], index: 4, kind: input, shape index: {}]
  %s5 = inlined_call_operand.vmem [shape: f32[1,64], index: 5, kind: input, shape index: {}]
  %s6 = inlined_call_operand.hbm [shape: bf16[16,64], index: 6, kind: output, shape index: {0}]
  %s7 = inlined_call_operand.hbm [shape: bf16[16,64], index: 7, kind: output, shape index: {1}]
  %8 = xla_tuple %s6, %s7
  %s9 = sld [smem:[#allocation0]]
  $region50: #{tpu_custom_call.1} parent=0
    _
  %s11 = ssub.s32 1, %s9
  %s12 = scalar_select 0, %s11, %s9
  $region1: #{tpu_custom_call.1} parent=0
    #allocation4 [shape = 'u8[4096]{0}', space=vmem, size = 0x1000, scoped, tag = 'output window, operand 0, single buffered']
    #allocation5 [shape = 's32[1]{0}', space=sflag, size = 0x4, scoped, tag = 'scoped memory for tpu_custom_call.1']
    #allocation6 [shape = 'u8[4096]{0}', space=vmem, size = 0x1000, scoped, tag = 'output window, operand 1, single buffered']
    #allocation7 [shape = 's32[1]{0}', space=sflag, size = 0x4, scoped, tag = 'scoped memory for tpu_custom_call.1']
    %13 = vsyncpa [#allocation5], 0
    %14 = vsyncpa [#allocation7], 0
    // Predicated region
    $region2: #{tpu_custom_call.1} parent=1 // pred_check
      _
    $region3: #{tpu_custom_call.1} parent=1 // pred_check_branch
      %16 = sbr.rel (0) target = $region5
    $region4: #{tpu_custom_call.1} parent=1 // pred_region
      _
    $region5: #{tpu_custom_call.1} parent=1 // pred_fallthru
      _
    // Predicated region
    $region6: #{tpu_custom_call.1} parent=1 // pred_check
      _
    $region7: #{tpu_custom_call.1} parent=1 // pred_check_branch
      %18 = sbr.rel (0) target = $region9
    $region8: #{tpu_custom_call.1} parent=1 // pred_region
      _
    $region9: #{tpu_custom_call.1} parent=1 // pred_fallthru
      _
    // Predicated region
    $region10: #{tpu_custom_call.1} parent=1 // pred_check
      _
    $region11: #{tpu_custom_call.1} parent=1 // pred_check_branch
      %20 = sbr.rel (0) target = $region13
    $region12: #{tpu_custom_call.1} parent=1 // pred_region
      _
    $region13: #{tpu_custom_call.1} parent=1 // pred_fallthru
      _
    // Predicated region
    $region14: #{tpu_custom_call.1} parent=1 // pred_check
      _
    $region15: #{tpu_custom_call.1} parent=1 // pred_check_branch
      %22 = sbr.rel (0) target = $region17
    $region16: #{tpu_custom_call.1} parent=1 // pred_region
      _
    $region17: #{tpu_custom_call.1} parent=1 // pred_fallthru
      _
    // Predicated region
    $region18: #{tpu_custom_call.1} parent=1 // pred_check
      _
    $region19: #{tpu_custom_call.1} parent=1 // pred_check_branch
      %24 = sbr.rel (0) target = $region21
    $region20: #{tpu_custom_call.1} parent=1 // pred_region
      _
    $region21: #{tpu_custom_call.1} parent=1 // pred_fallthru
      _
    // Predicated region
    $region22: #{tpu_custom_call.1} parent=1 // pred_check
      _
    $region23: #{tpu_custom_call.1} parent=1 // pred_check_branch
      %26 = sbr.rel (0) target = $region25
    $region24: #{tpu_custom_call.1} parent=1 // pred_region
      _
    $region25: #{tpu_custom_call.1} parent=1 // pred_fallthru
      _
    %p28 = scmp.eq.s32.totalorder 0, 0
    // Predicated region
    $region26: #{tpu_custom_call.1} parent=1 // pred_check
      %p29 = pneg %p28
    $region27: #{tpu_custom_call.1} parent=1 // pred_check_branch
      %31 = sbr.rel (%p29) target = $region29
    $region28: #{tpu_custom_call.1} parent=1 // pred_region
      %vm32 = vcmask 523264
      %33 = vst.msk [vmem:[#allocation2] sm:$0xff] %vm32, 0.0
      %34 = vst.msk [vmem:[#allocation2 + $0x8] sm:$0xff] %vm32, 0.0
      %35 = vst.msk [vmem:[#allocation3] sm:$0xff] %vm32, 0.0
      %36 = vst.msk [vmem:[#allocation3 + $0x8] sm:$0xff] %vm32, 0.0
    $region29: #{tpu_custom_call.1} parent=1 // pred_fallthru
      _
    %v37 = vld [vmem:[#allocation2] sm:$0xff]
    %v38 = vld [vmem:[#allocation2 + $0x8] sm:$0xff]
    %v39 = vld [vmem:[%s0] sm:$0xff]
    %v40 = vld [vmem:[%s0 + $0x8] sm:$0xff]
    %v41 = vld [vmem:[%s0 + $0x10] sm:$0xff]
    %v42 = vld [vmem:[%s0 + $0x18] sm:$0xff]
    %v43 = vpack.c.bf16 %v41, %v39
    %v44 = vpack.c.bf16 %v42, %v40
    %v45 = vld [vmem:[%s2] sm:$0xf]
    %v46 = vld [vmem:[%s2 + $0x4] sm:$0xf]
    %v47 = vld [vmem:[%s2 + $0x8] sm:$0xf]
    %v48 = vld [vmem:[%s2 + $0xc] sm:$0xf]
    %v49 = vld [vmem:[%s2 + $0x10] sm:$0xf]
    %v50 = vld [vmem:[%s2 + $0x14] sm:$0xf]
    %v51 = vld [vmem:[%s2 + $0x18] sm:$0xf]
    %v52 = vld [vmem:[%s2 + $0x1c] sm:$0xf]
    %v53 = vld [vmem:[%s2 + $0x20] sm:$0xf]
    %v54 = vld [vmem:[%s2 + $0x24] sm:$0xf]
    %v55 = vld [vmem:[%s2 + $0x28] sm:$0xf]
    %v56 = vld [vmem:[%s2 + $0x2c] sm:$0xf]
    %v57 = vld [vmem:[%s2 + $0x30] sm:$0xf]
    %v58 = vld [vmem:[%s2 + $0x34] sm:$0xf]
    %v59 = vld [vmem:[%s2 + $0x38] sm:$0xf]
    %v60 = vld [vmem:[%s2 + $0x3c] sm:$0xf]
    %v61 = vld [vmem:[%s2 + $0x40] sm:$0xf]
    %v62 = vld [vmem:[%s2 + $0x44] sm:$0xf]
    %v63 = vld [vmem:[%s2 + $0x48] sm:$0xf]
    %v64 = vld [vmem:[%s2 + $0x4c] sm:$0xf]
    %v65 = vld [vmem:[%s2 + $0x50] sm:$0xf]
    %v66 = vld [vmem:[%s2 + $0x54] sm:$0xf]
    %v67 = vld [vmem:[%s2 + $0x58] sm:$0xf]
    %v68 = vld [vmem:[%s2 + $0x5c] sm:$0xf]
    %v69 = vld [vmem:[%s2 + $0x60] sm:$0xf]
    %v70 = vld [vmem:[%s2 + $0x64] sm:$0xf]
    %v71 = vld [vmem:[%s2 + $0x68] sm:$0xf]
    %v72 = vld [vmem:[%s2 + $0x6c] sm:$0xf]
    %v73 = vld [vmem:[%s2 + $0x70] sm:$0xf]
    %v74 = vld [vmem:[%s2 + $0x74] sm:$0xf]
    %v75 = vld [vmem:[%s2 + $0x78] sm:$0xf]
    %v76 = vld [vmem:[%s2 + $0x7c] sm:$0xf]
    %v109 = vunpack.c.l.b16 %v45
    %v110 = vunpack.c.l.b16 %v46
    %v111 = vunpack.c.l.b16 %v47
    %v112 = vunpack.c.l.b16 %v48
    %v113 = vunpack.c.l.b16 %v49
    %v114 = vunpack.c.l.b16 %v50
    %v115 = vunpack.c.l.b16 %v51
    %v116 = vunpack.c.l.b16 %v52
    %v117 = vunpack.c.l.b16 %v53
    %v118 = vunpack.c.l.b16 %v54
    %v119 = vunpack.c.l.b16 %v55
    %v120 = vunpack.c.l.b16 %v56
    %v121 = vunpack.c.l.b16 %v57
    %v122 = vunpack.c.l.b16 %v58
    %v123 = vunpack.c.l.b16 %v59
    %v124 = vunpack.c.l.b16 %v60
    %v125 = vunpack.c.l.b16 %v61
    %v126 = vunpack.c.l.b16 %v62
    %v127 = vunpack.c.l.b16 %v63
    %v128 = vunpack.c.l.b16 %v64
    %v129 = vunpack.c.l.b16 %v65
    %v130 = vunpack.c.l.b16 %v66
    %v131 = vunpack.c.l.b16 %v67
    %v132 = vunpack.c.l.b16 %v68
    %v133 = vunpack.c.l.b16 %v69
    %v134 = vunpack.c.l.b16 %v70
    %v135 = vunpack.c.l.b16 %v71
    %v136 = vunpack.c.l.b16 %v72
    %v137 = vunpack.c.l.b16 %v73
    %v138 = vunpack.c.l.b16 %v74
    %v139 = vunpack.c.l.b16 %v75
    %v140 = vunpack.c.l.b16 %v76
    %v141 = vpack.c.b16 %v110, %v109
    %v142 = vpack.c.b16 %v112, %v111
    %v143 = vpack.c.b16 %v114, %v113
    %v144 = vpack.c.b16 %v116, %v115
    %v145 = vpack.c.b16 %v118, %v117
    %v146 = vpack.c.b16 %v120, %v119
    %v147 = vpack.c.b16 %v122, %v121
    %v148 = vpack.c.b16 %v124, %v123
    %v149 = vpack.c.b16 %v126, %v125
    %v150 = vpack.c.b16 %v128, %v127
    %v151 = vpack.c.b16 %v130, %v129
    %v152 = vpack.c.b16 %v132, %v131
    %v153 = vpack.c.b16 %v134, %v133
    %v154 = vpack.c.b16 %v136, %v135
    %v155 = vpack.c.b16 %v138, %v137
    %v156 = vpack.c.b16 %v140, %v139
    %173 = vmatprep.subr.bf16.mxu0 0
    %174 = vmatpush1.bf16.msra.mxu0 %v141
    %175 = vmatprep.subr.bf16.mxu0 0
    %176 = vmatpush1.bf16.msra.mxu0 %v142
    %177 = vmatprep.subr.bf16.mxu0 0
    %178 = vmatpush1.bf16.msra.mxu0 %v143
    %179 = vmatprep.subr.bf16.mxu0 0
    %180 = vmatpush1.bf16.msra.mxu0 %v144
    %181 = vmatprep.subr.bf16.mxu0 0
    %182 = vmatpush1.bf16.msra.mxu0 %v145
    %183 = vmatprep.subr.bf16.mxu0 0
    %184 = vmatpush1.bf16.msra.mxu0 %v146
    %185 = vmatprep.subr.bf16.mxu0 0
    %186 = vmatpush1.bf16.msra.mxu0 %v147
    %187 = vmatprep.subr.bf16.mxu0 0
    %188 = vmatpush1.bf16.msra.mxu0 %v148
    %189 = vmatprep.subr.bf16.mxu0 0
    %190 = vmatpush1.bf16.msra.mxu0 %v149
    %191 = vmatprep.subr.bf16.mxu0 0
    %192 = vmatpush1.bf16.msra.mxu0 %v150
    %193 = vmatprep.subr.bf16.mxu0 0
    %194 = vmatpush1.bf16.msra.mxu0 %v151
    %195 = vmatprep.subr.bf16.mxu0 0
    %196 = vmatpush1.bf16.msra.mxu0 %v152
    %197 = vmatprep.subr.bf16.mxu0 0
    %198 = vmatpush1.bf16.msra.mxu0 %v153
    %199 = vmatprep.subr.bf16.mxu0 0
    %200 = vmatpush1.bf16.msra.mxu0 %v154
    %201 = vmatprep.subr.bf16.mxu0 0
    %202 = vmatpush1.bf16.msra.mxu0 %v155
    %203 = vmatprep.subr.bf16.mxu0 0
    %204 = vmatpush1.bf16.msra.mxu0 %v156
    %205 = vmatprep.mubr.bf16.mxu0 %v44
    %206 = vmatmul.mubr.bf16.gmra.mrb[0].mxu0 %v43
    %v207 = vpop.f32.mrb[0].mxu0
    %v208 = vadd.f32 0.0, %v207
    %v209 = vpop.f32.mrb[0].mxu0
    %v210 = vpop.f32.mrb[0].mxu0
    %v211 = vadd.f32 0.0, %v210
    %v212 = vpop.f32.mrb[0].mxu0
    %213 = vdwg.mxu0
    %v214 = vadd.f32 %v37, %v208
    %v215 = vadd.f32 %v38, %v211
    %vm216 = vcmask 523264
    %217 = vst.msk [vmem:[#allocation2] sm:$0xff] %vm216, %v214
    %218 = vst.msk [vmem:[#allocation2 + $0x8] sm:$0xff] %vm216, %v215
    %v219 = vld [vmem:[#allocation3] sm:$0xff]
    %v220 = vld [vmem:[#allocation3 + $0x8] sm:$0xff]
    %v221 = vld [vmem:[%s1] sm:$0xff]
    %v222 = vld [vmem:[%s1 + $0x8] sm:$0xff]
    %v223 = vld [vmem:[%s1 + $0x10] sm:$0xff]
    %v224 = vld [vmem:[%s1 + $0x18] sm:$0xff]
    %v225 = vpack.c.bf16 %v223, %v221
    %v226 = vpack.c.bf16 %v224, %v222
    %v227 = vld [vmem:[%s3] sm:$0xf]
    %v228 = vld [vmem:[%s3 + $0x4] sm:$0xf]
    %v229 = vld [vmem:[%s3 + $0x8] sm:$0xf]
    %v230 = vld [vmem:[%s3 + $0xc] sm:$0xf]
    %v231 = vld [vmem:[%s3 + $0x10] sm:$0xf]
    %v232 = vld [vmem:[%s3 + $0x14] sm:$0xf]
    %v233 = vld [vmem:[%s3 + $0x18] sm:$0xf]
    %v234 = vld [vmem:[%s3 + $0x1c] sm:$0xf]
    %v235 = vld [vmem:[%s3 + $0x20] sm:$0xf]
    %v236 = vld [vmem:[%s3 + $0x24] sm:$0xf]
    %v237 = vld [vmem:[%s3 + $0x28] sm:$0xf]
    %v238 = vld [vmem:[%s3 + $0x2c] sm:$0xf]
    %v239 = vld [vmem:[%s3 + $0x30] sm:$0xf]
    %v240 = vld [vmem:[%s3 + $0x34] sm:$0xf]
    %v241 = vld [vmem:[%s3 + $0x38] sm:$0xf]
    %v242 = vld [vmem:[%s3 + $0x3c] sm:$0xf]
    %v243 = vld [vmem:[%s3 + $0x40] sm:$0xf]
    %v244 = vld [vmem:[%s3 + $0x44] sm:$0xf]
    %v245 = vld [vmem:[%s3 + $0x48] sm:$0xf]
    %v246 = vld [vmem:[%s3 + $0x4c] sm:$0xf]
    %v247 = vld [vmem:[%s3 + $0x50] sm:$0xf]
    %v248 = vld [vmem:[%s3 + $0x54] sm:$0xf]
    %v249 = vld [vmem:[%s3 + $0x58] sm:$0xf]
    %v250 = vld [vmem:[%s3 + $0x5c] sm:$0xf]
    %v251 = vld [vmem:[%s3 + $0x60] sm:$0xf]
    %v252 = vld [vmem:[%s3 + $0x64] sm:$0xf]
    %v253 = vld [vmem:[%s3 + $0x68] sm:$0xf]
    %v254 = vld [vmem:[%s3 + $0x6c] sm:$0xf]
    %v255 = vld [vmem:[%s3 + $0x70] sm:$0xf]
    %v256 = vld [vmem:[%s3 + $0x74] sm:$0xf]
    %v257 = vld [vmem:[%s3 + $0x78] sm:$0xf]
    %v258 = vld [vmem:[%s3 + $0x7c] sm:$0xf]
    %v291 = vunpack.c.l.b16 %v227
    %v292 = vunpack.c.l.b16 %v228
    %v293 = vunpack.c.l.b16 %v229
    %v294 = vunpack.c.l.b16 %v230
    %v295 = vunpack.c.l.b16 %v231
    %v296 = vunpack.c.l.b16 %v232
    %v297 = vunpack.c.l.b16 %v233
    %v298 = vunpack.c.l.b16 %v234
    %v299 = vunpack.c.l.b16 %v235
    %v300 = vunpack.c.l.b16 %v236
    %v301 = vunpack.c.l.b16 %v237
    %v302 = vunpack.c.l.b16 %v238
    %v303 = vunpack.c.l.b16 %v239
    %v304 = vunpack.c.l.b16 %v240
    %v305 = vunpack.c.l.b16 %v241
    %v306 = vunpack.c.l.b16 %v242
    %v307 = vunpack.c.l.b16 %v243
    %v308 = vunpack.c.l.b16 %v244
    %v309 = vunpack.c.l.b16 %v245
    %v310 = vunpack.c.l.b16 %v246
    %v311 = vunpack.c.l.b16 %v247
    %v312 = vunpack.c.l.b16 %v248
    %v313 = vunpack.c.l.b16 %v249
    %v314 = vunpack.c.l.b16 %v250
    %v315 = vunpack.c.l.b16 %v251
    %v316 = vunpack.c.l.b16 %v252
    %v317 = vunpack.c.l.b16 %v253
    %v318 = vunpack.c.l.b16 %v254
    %v319 = vunpack.c.l.b16 %v255
    %v320 = vunpack.c.l.b16 %v256
    %v321 = vunpack.c.l.b16 %v257
    %v322 = vunpack.c.l.b16 %v258
    %v323 = vpack.c.b16 %v292, %v291
    %v324 = vpack.c.b16 %v294, %v293
    %v325 = vpack.c.b16 %v296, %v295
    %v326 = vpack.c.b16 %v298, %v297
    %v327 = vpack.c.b16 %v300, %v299
    %v328 = vpack.c.b16 %v302, %v301
    %v329 = vpack.c.b16 %v304, %v303
    %v330 = vpack.c.b16 %v306, %v305
    %v331 = vpack.c.b16 %v308, %v307
    %v332 = vpack.c.b16 %v310, %v309
    %v333 = vpack.c.b16 %v312, %v311
    %v334 = vpack.c.b16 %v314, %v313
    %v335 = vpack.c.b16 %v316, %v315
    %v336 = vpack.c.b16 %v318, %v317
    %v337 = vpack.c.b16 %v320, %v319
    %v338 = vpack.c.b16 %v322, %v321
    %355 = vmatprep.subr.bf16.mxu0 0
    %356 = vmatpush1.bf16.msra.mxu0 %v323
    %357 = vmatprep.subr.bf16.mxu0 0
    %358 = vmatpush1.bf16.msra.mxu0 %v324
    %359 = vmatprep.subr.bf16.mxu0 0
    %360 = vmatpush1.bf16.msra.mxu0 %v325
    %361 = vmatprep.subr.bf16.mxu0 0
    %362 = vmatpush1.bf16.msra.mxu0 %v326
    %363 = vmatprep.subr.bf16.mxu0 0
    %364 = vmatpush1.bf16.msra.mxu0 %v327
    %365 = vmatprep.subr.bf16.mxu0 0
    %366 = vmatpush1.bf16.msra.mxu0 %v328
    %367 = vmatprep.subr.bf16.mxu0 0
    %368 = vmatpush1.bf16.msra.mxu0 %v329
    %369 = vmatprep.subr.bf16.mxu0 0
    %370 = vmatpush1.bf16.msra.mxu0 %v330
    %371 = vmatprep.subr.bf16.mxu0 0
    %372 = vmatpush1.bf16.msra.mxu0 %v331
    %373 = vmatprep.subr.bf16.mxu0 0
    %374 = vmatpush1.bf16.msra.mxu0 %v332
    %375 = vmatprep.subr.bf16.mxu0 0
    %376 = vmatpush1.bf16.msra.mxu0 %v333
    %377 = vmatprep.subr.bf16.mxu0 0
    %378 = vmatpush1.bf16.msra.mxu0 %v334
    %379 = vmatprep.subr.bf16.mxu0 0
    %380 = vmatpush1.bf16.msra.mxu0 %v335
    %381 = vmatprep.subr.bf16.mxu0 0
    %382 = vmatpush1.bf16.msra.mxu0 %v336
    %383 = vmatprep.subr.bf16.mxu0 0
    %384 = vmatpush1.bf16.msra.mxu0 %v337
    %385 = vmatprep.subr.bf16.mxu0 0
    %386 = vmatpush1.bf16.msra.mxu0 %v338
    %387 = vmatprep.mubr.bf16.mxu0 %v226
    %388 = vmatmul.mubr.bf16.gmra.mrb[0].mxu0 %v225
    %v389 = vpop.f32.mrb[0].mxu0
    %v390 = vadd.f32 0.0, %v389
    %v391 = vpop.f32.mrb[0].mxu0
    %v392 = vpop.f32.mrb[0].mxu0
    %v393 = vadd.f32 0.0, %v392
    %v394 = vpop.f32.mrb[0].mxu0
    %395 = vdwg.mxu0
    %v396 = vadd.f32 %v219, %v390
    %v397 = vadd.f32 %v220, %v393
    %398 = vst.msk [vmem:[#allocation3] sm:$0xff] %vm216, %v396
    %399 = vst.msk [vmem:[#allocation3 + $0x8] sm:$0xff] %vm216, %v397
    // Predicated region
    $region30: #{tpu_custom_call.1} parent=1 // pred_check
      %p400 = pneg %p28
    $region31: #{tpu_custom_call.1} parent=1 // pred_check_branch
      %402 = sbr.rel (%p400) target = $region33
    $region32: #{tpu_custom_call.1} parent=1 // pred_region
      %v403 = vld [vmem:[#allocation2] sm:$0xff]
      %v404 = vld [vmem:[#allocation2 + $0x8] sm:$0xff]
      %v405 = vld [vmem:[%s4] sm:$0x1]
      %v407 = vlaneseq
      %v408 = vshrl.u32 %v407, 7
      %v409 = vsub.s32 0, %v408
      %v410 = vrot.slane %v405, %v409
      %v412 = vadd.f32 %v403, %v410
      %v413 = vadd.f32 %v404, %v410
      %v414 = vpack.c.bf16 %v413, %v412
      %v416 = vunpack.c.l.b16 %v414
      %v417 = vunpack.c.h.b16 %v414
      %v418 = vpack.c.b16 %v416, %v416
      %v419 = vpack.c.b16 %v417, %v417
      %vm422 = vcmask 519168
      %423 = vst.msk [vmem:[#allocation4] sm:$0xf] %vm422, %v418
      %424 = vst.msk [vmem:[#allocation4 + $0x4] sm:$0xf] %vm422, %v419
      %v425 = vld [vmem:[#allocation3] sm:$0xff]
      %v426 = vld [vmem:[#allocation3 + $0x8] sm:$0xff]
      %v427 = vld [vmem:[%s5] sm:$0x1]
      %v429 = vlaneseq
      %v430 = vshrl.u32 %v429, 7
      %v431 = vsub.s32 0, %v430
      %v432 = vrot.slane %v427, %v431
      %v434 = vadd.f32 %v425, %v432
      %v435 = vadd.f32 %v426, %v432
      %v436 = vpack.c.bf16 %v435, %v434
      %v438 = vunpack.c.l.b16 %v436
      %v439 = vunpack.c.h.b16 %v436
      %v440 = vpack.c.b16 %v438, %v438
      %v441 = vpack.c.b16 %v439, %v439
      %444 = vst.msk [vmem:[#allocation6] sm:$0xf] %vm422, %v440
      %445 = vst.msk [vmem:[#allocation6 + $0x4] sm:$0xf] %vm422, %v441
    $region33: #{tpu_custom_call.1} parent=1 // pred_fallthru
      _
    // Predicated region
    $region34: #{tpu_custom_call.1} parent=1 // pred_check
      _
    $region35: #{tpu_custom_call.1} parent=1 // pred_check_branch
      %447 = sbr.rel (0) target = $region37
    $region36: #{tpu_custom_call.1} parent=1 // pred_region
      %s449 = ssub.s32 128, 128
      %450 = vsyncadd [#allocation5], %s449
      %s451 = sshll.u32 [#allocation4], 4
      %s452 = int_to_ptr.vmem [resolvable:$true] %s451
      %457 = dma.vmem_to_hbm [thread:$0]  %s452, 128, %s6, [#allocation5], 64, 64, 4
    $region37: #{tpu_custom_call.1} parent=1 // pred_fallthru
      _
    // Predicated region
    $region38: #{tpu_custom_call.1} parent=1 // pred_check
      _
    $region39: #{tpu_custom_call.1} parent=1 // pred_check_branch
      %459 = sbr.rel (0) target = $region41
    $region40: #{tpu_custom_call.1} parent=1 // pred_region
      %s461 = ssub.s32 128, 128
      %462 = vsyncadd [#allocation7], %s461
      %s463 = sshll.u32 [#allocation6], 4
      %s464 = int_to_ptr.vmem [resolvable:$true] %s463
      %469 = dma.vmem_to_hbm [thread:$0]  %s464, 128, %s7, [#allocation7], 64, 64, 4
    $region41: #{tpu_custom_call.1} parent=1 // pred_fallthru
      _
    // Predicated region
    $region42: #{tpu_custom_call.1} parent=1 // pred_check
      _
    $region43: #{tpu_custom_call.1} parent=1 // pred_check_branch
      %471 = sbr.rel (0) target = $region45
    $region44: #{tpu_custom_call.1} parent=1 // pred_region
      %472 = dma.done [#allocation5], 128
    $region45: #{tpu_custom_call.1} parent=1 // pred_fallthru
      _
    // Predicated region
    $region46: #{tpu_custom_call.1} parent=1 // pred_check
      _
    $region47: #{tpu_custom_call.1} parent=1 // pred_check_branch
      %474 = sbr.rel (0) target = $region49
    $region48: #{tpu_custom_call.1} parent=1 // pred_region
      %475 = dma.done [#allocation7], 128
    $region49: #{tpu_custom_call.1} parent=1 // pred_fallthru
      _
    %476 = vsyncpa [#allocation5], 1
    %477 = vsyncpa [#allocation7], 1

</llo_original>
